<compile_context>
chip_gen: v7x
topology: tpu7x:2x2x1
jax: 0.10.0
libtpu: 0.0.40
codegen_flags: <defaults>
</compile_context>

<pallas_src>
import functools
import math

import jax
import jax.numpy as jnp
from jax.experimental import pallas as pl
from jax.experimental.pallas import tpu as pltpu


def _msa_kernel(x_ref, w_ref, b_ref, o_ref, *, n_heads, d_head):
    # x_ref: (Bblk, N, d)   a block of batch elements, all heads (lane-dense)
    # w_ref: (d, 3*d)       block-diagonal fused QKV weight, (in, out) layout, Q pre-scaled
    # b_ref: (1, 3*d)       fused QKV bias, Q part pre-scaled
    # o_ref: (Bblk, N, d)
    d = n_heads * d_head
    x = x_ref[...]                                    # (Bblk, N, d), native dtype
    w = w_ref[...]                                    # (d, 3d)
    b = b_ref[...].astype(jnp.float32)                # (1, 3d)

    bblk, n, _ = x.shape
    # Single fused QKV projection for the whole batch block: one wide MXU pass.
    x2 = x.reshape(bblk * n, d)
    qkv = jnp.dot(x2, w, preferred_element_type=jnp.float32) + b     # (Bblk*N, 3d), f32
    qkv = qkv.reshape(bblk, n, 3 * d)

    in_dtype = x.dtype
    for h in range(n_heads):                          # static, fully unrolled (n_heads tiny)
        lo, hi = h * d_head, (h + 1) * d_head
        # MXU operands in model dtype (no-op for f32; full-rate bf16 on v6e/v7x).
        qh = qkv[:, :, 0 * d + lo:0 * d + hi].astype(in_dtype)   # pre-scaled by 1/sqrt(d_head)
        kh = qkv[:, :, 1 * d + lo:1 * d + hi].astype(in_dtype)
        vh = qkv[:, :, 2 * d + lo:2 * d + hi].astype(in_dtype)

        # q @ k^T as a batched contraction of the last dims -> no k.T materialization.
        s = jnp.einsum("bqd,bkd->bqk", qh, kh,
                       preferred_element_type=jnp.float32)        # (Bblk, N, N), f32

        # numerically-stable softmax over the last axis (== nn.Softmax(dim=-1))
        m = jnp.max(s, axis=-1, keepdims=True)
        e = jnp.exp(s - m)
        denom = jnp.sum(e, axis=-1, keepdims=True)
        inv = pl.reciprocal(denom, approx=True)       # EUP slot (VALU-free)
        inv = inv * (2.0 - denom * inv)               # one Newton step -> f32 accuracy
        attn = (e * inv).astype(in_dtype)

        pv = jnp.einsum("bqk,bkd->bqd", attn, vh,
                        preferred_element_type=jnp.float32)       # (Bblk, N, d_head), f32
        # Direct per-head store: no concat relayout, no H*N*d_head live vregs at loop end.
        o_ref[:, :, lo:hi] = pv.astype(o_ref.dtype)


def _fuse_qkv_params(wq, wk, wv, bq, bk, bv, n_heads, d_head, dtype):
    """Fold the per-head torch Linear params into one block-diagonal (d, 3d) weight
    ((in, out) layout) and one (1, 3d) bias.  The 1/sqrt(d_head) attention scale is folded
    into the Q columns and Q bias.  Done once, outside the kernel."""
    d = n_heads * d_head
    eye = jnp.eye(n_heads, dtype=jnp.float32)
    scale = 1.0 / math.sqrt(d_head)

    def block_diag(w):                      # w: (H, d_head, d_head), torch (out, in) layout
        wt = jnp.swapaxes(w, -1, -2).astype(jnp.float32)       # (H, in, out)
        full = jnp.einsum("hij,hg->higj", wt, eye)             # zeros off the diagonal blocks
        return full.reshape(d, d)

    w_qkv = jnp.concatenate(
        [block_diag(wq) * scale, block_diag(wk), block_diag(wv)], axis=1)
    b_qkv = jnp.concatenate(
        [bq.reshape(d).astype(jnp.float32) * scale,
         bk.reshape(d).astype(jnp.float32),
         bv.reshape(d).astype(jnp.float32)]).reshape(1, 3 * d)
    return w_qkv.astype(dtype), b_qkv.astype(dtype)


def _pick_batch_block(B, N, d, n_heads, vmem_budget_bytes=2 << 20):
    """Largest divisor of B whose per-step f32 working set (qkv + one head's scores +
    output block) stays under a small VMEM budget."""
    per_elem = 4 * (N * 3 * d + N * N + N * d)        # bytes per batch element, f32
    best = 1
    for bblk in range(1, B + 1):
        if B % bblk == 0 and bblk * per_elem <= vmem_budget_bytes:
            best = bblk
    return best


def my_msa_pallas(x, wq, wk, wv, bq, bk, bv, *, n_heads, batch_block=None):
    """x: (B, N, d). w*: (n_heads, d_head, d_head) in PyTorch (out, in) layout.
    b*: (n_heads, d_head).  Returns (B, N, d), identical to MyMSA.forward."""
    B, N, d = x.shape
    d_head = d // n_heads
    w_qkv, b_qkv = _fuse_qkv_params(wq, wk, wv, bq, bk, bv, n_heads, d_head, x.dtype)

    if batch_block is None:
        batch_block = _pick_batch_block(B, N, d, n_heads)
    assert B % batch_block == 0
    num_steps = B // batch_block

    kernel = functools.partial(_msa_kernel, n_heads=n_heads, d_head=d_head)

    return pl.pallas_call(
        kernel,
        out_shape=jax.ShapeDtypeStruct((B, N, d), x.dtype),
        grid_spec=pltpu.PrefetchScalarGridSpec(
            num_scalar_prefetch=0,
            grid=(num_steps,),   # one step per batch block; all heads handled inside
            in_specs=[
                pl.BlockSpec((batch_block, N, d), lambda b: (b, 0, 0)),   # x
                pl.BlockSpec((d, 3 * d), lambda b: (0, 0)),               # fused W (resident)
                pl.BlockSpec((1, 3 * d), lambda b: (0, 0)),               # fused bias (resident)
            ],
            out_specs=pl.BlockSpec((batch_block, N, d), lambda b: (b, 0, 0)),
        ),
        compiler_params=pltpu.CompilerParams(
            dimension_semantics=("parallel",),   # shards steps across TCs on v7x
        ),
    )(x, w_qkv, b_qkv)


def my_msa_reference(x, wq, wk, wv, bq, bk, bv, *, n_heads):
    """Pure-JAX reference mirroring the PyTorch loop semantics."""
    B, N, d = x.shape
    d_head = d // n_heads
    outs = []
    for b in range(B):
        head_outs = []
        for h in range(n_heads):
            seq = x[b, :, h * d_head:(h + 1) * d_head]
            q = seq @ wq[h].T + bq[h]
            k = seq @ wk[h].T + bk[h]
            v = seq @ wv[h].T + bv[h]
            scores = (q @ k.T) / math.sqrt(d_head)
            attn = jax.nn.softmax(scores, axis=-1)
            head_outs.append(attn @ v)
        outs.append(jnp.concatenate(head_outs, axis=-1))
    return jnp.stack(outs, axis=0)


if __name__ == "__main__":
    # small shapes consistent with the module: batch=2, seq=8, hidden d=32, 2 heads
    B, N, d, n_heads = 2, 8, 32, 2
    d_head = d // n_heads

    key = jax.random.PRNGKey(0)
    keys = jax.random.split(key, 8)

    x = jax.random.normal(keys[0], (B, N, d), dtype=jnp.float32)

    # deterministic nn.Linear-style init: U(-1/sqrt(fan_in), 1/sqrt(fan_in))
    bound = 1.0 / math.sqrt(d_head)
    wq = jax.random.uniform(keys[1], (n_heads, d_head, d_head), jnp.float32, -bound, bound)
    wk = jax.random.uniform(keys[2], (n_heads, d_head, d_head), jnp.float32, -bound, bound)
    wv = jax.random.uniform(keys[3], (n_heads, d_head, d_head), jnp.float32, -bound, bound)
    bq = jax.random.uniform(keys[4], (n_heads, d_head), jnp.float32, -bound, bound)
    bk = jax.random.uniform(keys[5], (n_heads, d_head), jnp.float32, -bound, bound)
    bv = jax.random.uniform(keys[6], (n_heads, d_head), jnp.float32, -bound, bound)

    out = my_msa_pallas(x, wq, wk, wv, bq, bk, bv, n_heads=n_heads)
    out = jax.block_until_ready(out)

    ref = my_msa_reference(x, wq, wk, wv, bq, bk, bv, n_heads=n_heads)
    assert out.shape == (B, N, d)
    # tolerance covers TPU MXU f32 pass-splitting + approx-reciprocal (Newton-refined)
    assert jnp.allclose(out, ref, atol=1e-4, rtol=1e-4), "mismatch vs reference"

    print("KERNEL_OK")
</pallas_src>

<mosaic_0001>
module attributes {stable_mosaic.version = 11 : i64} {
  func.func @_msa_kernel(%arg0: i32, %arg1: memref<2x8x32xf32, #tpu.memory_space<vmem>>, %arg2: memref<32x96xf32, #tpu.memory_space<vmem>>, %arg3: memref<1x96xf32, #tpu.memory_space<vmem>>, %arg4: memref<2x8x32xf32, #tpu.memory_space<vmem>>) attributes {dimension_semantics = [#tpu.dimension_semantics<parallel>], iteration_bounds = array<i64: 1>, scalar_prefetch = 0 : i64, scratch_operands = 0 : i64, tpu.core_type = #tpu.core_type<tc>, window_params = [{transform_indices = @transform_0, window_bounds = array<i64: 2, 8, 32>}, {pipeline_mode = #tpu.pipeline_mode<synchronous>, transform_indices = @transform_1, window_bounds = array<i64: 32, 96>}, {pipeline_mode = #tpu.pipeline_mode<synchronous>, transform_indices = @transform_2, window_bounds = array<i64: 1, 96>}, {transform_indices = @transform_3, window_bounds = array<i64: 2, 8, 32>}]} {
    %c0 = arith.constant 0 : index
    %c0_0 = arith.constant 0 : index
    %c0_1 = arith.constant 0 : index
    %0 = vector.load %arg1[%c0, %c0_0, %c0_1] : memref<2x8x32xf32, #tpu.memory_space<vmem>>, vector<2x8x32xf32>
    %c0_2 = arith.constant 0 : index
    %c0_3 = arith.constant 0 : index
    %1 = vector.load %arg2[%c0_2, %c0_3] : memref<32x96xf32, #tpu.memory_space<vmem>>, vector<32x96xf32>
    %c0_4 = arith.constant 0 : index
    %c0_5 = arith.constant 0 : index
    %2 = vector.load %arg3[%c0_4, %c0_5] : memref<1x96xf32, #tpu.memory_space<vmem>>, vector<1x96xf32>
    %3 = vector.shape_cast %0 : vector<2x8x32xf32> to vector<16x32xf32>
    %cst = arith.constant dense<0.000000e+00> : vector<16x96xf32>
    %4 = tpu.matmul %3, %1, %cst {dimension_numbers = #tpu.dot_dimension_numbers<[1], [0], [0], [1], [0, 0, 1, 1], [], []>} : vector<16x32xf32>, vector<32x96xf32>, vector<16x96xf32> -> vector<16x96xf32>
    %5 = vector.broadcast %2 : vector<1x96xf32> to vector<16x96xf32>
    %6 = arith.addf %4, %5 : vector<16x96xf32>
    %7 = vector.shape_cast %6 : vector<16x96xf32> to vector<2x8x96xf32>
    %8 = vector.extract_strided_slice %7 {offsets = [0, 0, 0], sizes = [2, 8, 16], strides = [1, 1, 1]} : vector<2x8x96xf32> to vector<2x8x16xf32>
    %9 = vector.extract_strided_slice %7 {offsets = [0, 0, 32], sizes = [2, 8, 16], strides = [1, 1, 1]} : vector<2x8x96xf32> to vector<2x8x16xf32>
    %10 = vector.extract_strided_slice %7 {offsets = [0, 0, 64], sizes = [2, 8, 16], strides = [1, 1, 1]} : vector<2x8x96xf32> to vector<2x8x16xf32>
    "tpu.trace_start"() <{level = 10 : i32, message = "bqd,bkd->bqk"}> : () -> ()
    %cst_6 = arith.constant dense<0.000000e+00> : vector<2x8x8xf32>
    %11 = tpu.matmul %8, %9, %cst_6 {dimension_numbers = #tpu.dot_dimension_numbers<[2], [2], [1], [1], [0, 0, 0, 1, 1, 1], [0], [0]>} : vector<2x8x16xf32>, vector<2x8x16xf32>, vector<2x8x8xf32> -> vector<2x8x8xf32>
    "tpu.trace_stop"() : () -> ()
    %cst_7 = arith.constant dense<0xFF800000> : vector<2x8xf32>
    %12 = vector.multi_reduction <maximumf>, %11, %cst_7 [2] : vector<2x8x8xf32> to vector<2x8xf32>
    %13 = vector.shape_cast %12 : vector<2x8xf32> to vector<2x8x1xf32>
    %14 = vector.broadcast %13 : vector<2x8x1xf32> to vector<2x8x8xf32>
    %15 = arith.subf %11, %14 : vector<2x8x8xf32>
    %16 = math.exp %15 : vector<2x8x8xf32>
    %cst_8 = arith.constant dense<0.000000e+00> : vector<2x8xf32>
    %17 = vector.multi_reduction <add>, %16, %cst_8 [2] : vector<2x8x8xf32> to vector<2x8xf32>
    %18 = vector.shape_cast %17 : vector<2x8xf32> to vector<2x8x1xf32>
    %19 = tpu.reciprocal %18 {approx = true} : vector<2x8x1xf32> -> vector<2x8x1xf32>
    %20 = arith.mulf %18, %19 : vector<2x8x1xf32>
    %cst_9 = arith.constant 2.000000e+00 : f32
    %21 = vector.broadcast %cst_9 : f32 to vector<2x8x1xf32>
    %22 = arith.subf %21, %20 : vector<2x8x1xf32>
    %23 = arith.mulf %19, %22 : vector<2x8x1xf32>
    %24 = vector.broadcast %23 : vector<2x8x1xf32> to vector<2x8x8xf32>
    %25 = arith.mulf %16, %24 : vector<2x8x8xf32>
    "tpu.trace_start"() <{level = 10 : i32, message = "bqk,bkd->bqd"}> : () -> ()
    %cst_10 = arith.constant dense<0.000000e+00> : vector<2x8x16xf32>
    %26 = tpu.matmul %25, %10, %cst_10 {dimension_numbers = #tpu.dot_dimension_numbers<[2], [1], [1], [2], [0, 0, 0, 1, 1, 2], [0], [0]>} : vector<2x8x8xf32>, vector<2x8x16xf32>, vector<2x8x16xf32> -> vector<2x8x16xf32>
    "tpu.trace_stop"() : () -> ()
    %c0_11 = arith.constant 0 : index
    %c0_12 = arith.constant 0 : index
    %c0_13 = arith.constant 0 : index
    %27 = vector.load %arg4[%c0_11, %c0_12, %c0_13] : memref<2x8x32xf32, #tpu.memory_space<vmem>>, vector<2x8x16xf32>
    tpu.vector_store %arg4[%c0_11, %c0_12, %c0_13], %26 {strides = array<i32>} : memref<2x8x32xf32, #tpu.memory_space<vmem>>, vector<2x8x16xf32>,
    %28 = vector.extract_strided_slice %7 {offsets = [0, 0, 16], sizes = [2, 8, 16], strides = [1, 1, 1]} : vector<2x8x96xf32> to vector<2x8x16xf32>
    %29 = vector.extract_strided_slice %7 {offsets = [0, 0, 48], sizes = [2, 8, 16], strides = [1, 1, 1]} : vector<2x8x96xf32> to vector<2x8x16xf32>
    %30 = vector.extract_strided_slice %7 {offsets = [0, 0, 80], sizes = [2, 8, 16], strides = [1, 1, 1]} : vector<2x8x96xf32> to vector<2x8x16xf32>
    "tpu.trace_start"() <{level = 10 : i32, message = "bqd,bkd->bqk"}> : () -> ()
    %cst_14 = arith.constant dense<0.000000e+00> : vector<2x8x8xf32>
    %31 = tpu.matmul %28, %29, %cst_14 {dimension_numbers = #tpu.dot_dimension_numbers<[2], [2], [1], [1], [0, 0, 0, 1, 1, 1], [0], [0]>} : vector<2x8x16xf32>, vector<2x8x16xf32>, vector<2x8x8xf32> -> vector<2x8x8xf32>
    "tpu.trace_stop"() : () -> ()
    %cst_15 = arith.constant dense<0xFF800000> : vector<2x8xf32>
    %32 = vector.multi_reduction <maximumf>, %31, %cst_15 [2] : vector<2x8x8xf32> to vector<2x8xf32>
    %33 = vector.shape_cast %32 : vector<2x8xf32> to vector<2x8x1xf32>
    %34 = vector.broadcast %33 : vector<2x8x1xf32> to vector<2x8x8xf32>
    %35 = arith.subf %31, %34 : vector<2x8x8xf32>
    %36 = math.exp %35 : vector<2x8x8xf32>
    %cst_16 = arith.constant dense<0.000000e+00> : vector<2x8xf32>
    %37 = vector.multi_reduction <add>, %36, %cst_16 [2] : vector<2x8x8xf32> to vector<2x8xf32>
    %38 = vector.shape_cast %37 : vector<2x8xf32> to vector<2x8x1xf32>
    %39 = tpu.reciprocal %38 {approx = true} : vector<2x8x1xf32> -> vector<2x8x1xf32>
    %40 = arith.mulf %38, %39 : vector<2x8x1xf32>
    %cst_17 = arith.constant 2.000000e+00 : f32
    %41 = vector.broadcast %cst_17 : f32 to vector<2x8x1xf32>
    %42 = arith.subf %41, %40 : vector<2x8x1xf32>
    %43 = arith.mulf %39, %42 : vector<2x8x1xf32>
    %44 = vector.broadcast %43 : vector<2x8x1xf32> to vector<2x8x8xf32>
    %45 = arith.mulf %36, %44 : vector<2x8x8xf32>
    "tpu.trace_start"() <{level = 10 : i32, message = "bqk,bkd->bqd"}> : () -> ()
    %cst_18 = arith.constant dense<0.000000e+00> : vector<2x8x16xf32>
    %46 = tpu.matmul %45, %30, %cst_18 {dimension_numbers = #tpu.dot_dimension_numbers<[2], [1], [1], [2], [0, 0, 0, 1, 1, 2], [0], [0]>} : vector<2x8x8xf32>, vector<2x8x16xf32>, vector<2x8x16xf32> -> vector<2x8x16xf32>
    "tpu.trace_stop"() : () -> ()
    %c0_19 = arith.constant 0 : index
    %c0_20 = arith.constant 0 : index
    %c16 = arith.constant 16 : index
    %47 = vector.load %arg4[%c0_19, %c0_20, %c16] : memref<2x8x32xf32, #tpu.memory_space<vmem>>, vector<2x8x16xf32>
    tpu.vector_store %arg4[%c0_19, %c0_20, %c16], %46 {strides = array<i32>} : memref<2x8x32xf32, #tpu.memory_space<vmem>>, vector<2x8x16xf32>,
    return
  }
  func.func @transform_0(%arg0: i32) -> (i32, i32, i32) {
    %c0_i32 = arith.constant 0 : i32
    %c0_i32_0 = arith.constant 0 : i32
    %c0_i32_1 = arith.constant 0 : i32
    return %arg0, %c0_i32, %c0_i32_0 : i32, i32, i32
  }
  func.func @transform_1(%arg0: i32) -> (i32, i32) {
    %c0_i32 = arith.constant 0 : i32
    %c0_i32_0 = arith.constant 0 : i32
    %c0_i32_1 = arith.constant 0 : i32
    return %c0_i32, %c0_i32_0 : i32, i32
  }
  func.func @transform_2(%arg0: i32) -> (i32, i32) {
    %c0_i32 = arith.constant 0 : i32
    %c0_i32_0 = arith.constant 0 : i32
    %c0_i32_1 = arith.constant 0 : i32
    return %c0_i32, %c0_i32_0 : i32, i32
  }
  func.func @transform_3(%arg0: i32) -> (i32, i32, i32) {
    %c0_i32 = arith.constant 0 : i32
    %c0_i32_0 = arith.constant 0 : i32
    %c0_i32_1 = arith.constant 0 : i32
    return %arg0, %c0_i32, %c0_i32_0 : i32, i32, i32
  }
}

</mosaic_0001>

<llo_original>
// kernel: tpu_custom_call.1
$region0: #{tpu_custom_call.1}
  #allocation0 [shape = 'u32[]', space=smem, size = 0x4, offset = 0x4, fixed_abs, tag = 'smem constant byte address 0x4 - core index']
  #allocation1 [shape = 'u32[144,128]{1,0:T(1,128)}', space=vmem, size = 0x12000, scoped, tag = 'internal scratch']
  %s0 = inlined_call_operand.hbm [shape: f32[2,8,32], index: 0, kind: input, shape index: {}]
  %s1 = inlined_call_operand.hbm [shape: f32[32,96], index: 1, kind: input, shape index: {}]
  %s2 = inlined_call_operand.vmem [shape: f32[1,96], index: 2, kind: input, shape index: {}]
  %s3 = inlined_call_operand.hbm [shape: f32[2,8,32], index: 3, kind: output, shape index: {}]
  %s4 = sld [smem:[#allocation0]]
  $region30: #{tpu_custom_call.1} parent=0
    _
  %s6 = ssub.s32 1, %s4
  %s7 = scalar_select 0, %s6, %s4
  $region1: #{tpu_custom_call.1} parent=0
    #allocation2 [shape = 'u8[8192]{0}', space=vmem, size = 0x2000, scoped, tag = 'input window, operand 0, single buffered']
    #allocation3 [shape = 's32[1]{0}', space=sflag, size = 0x4, scoped, tag = 'scoped memory for tpu_custom_call.1']
    #allocation4 [shape = 's32[1]{0}', space=sflag, size = 0x4, scoped, tag = 'scoped memory for tpu_custom_call.1']
    #allocation5 [shape = 'u8[16384]{0}', space=vmem, size = 0x4000, scoped, tag = 'input window, operand 1, single buffered']
    #allocation6 [shape = 's32[1]{0}', space=sflag, size = 0x4, scoped, tag = 'scoped memory for tpu_custom_call.1']
    #allocation7 [shape = 'u8[8192]{0}', space=vmem, size = 0x2000, scoped, tag = 'output window, operand 0, single buffered']
    %8 = vsyncpa [#allocation3], 0
    %9 = vsyncpa [#allocation6], 0
    %10 = vsyncpa [#allocation4], 0
    // Predicated region
    $region2: #{tpu_custom_call.1} parent=1 // pred_check
      _
    $region3: #{tpu_custom_call.1} parent=1 // pred_check_branch
      %12 = sbr.rel (0) target = $region5
    $region4: #{tpu_custom_call.1} parent=1 // pred_region
      %s14 = ssub.s32 256, 256
      %15 = vsyncadd [#allocation3], %s14
      %s16 = sshll.u32 [#allocation2], 4
      %s17 = int_to_ptr.vmem [resolvable:$true] %s16
      %22 = dma.hbm_to_vmem [thread:$0]  %s0, 256, %s17, [#allocation3], 128, 128, 8
    $region5: #{tpu_custom_call.1} parent=1 // pred_fallthru
      _
    // Predicated region
    $region6: #{tpu_custom_call.1} parent=1 // pred_check
      _
    $region7: #{tpu_custom_call.1} parent=1 // pred_check_branch
      %24 = sbr.rel (0) target = $region9
    $region8: #{tpu_custom_call.1} parent=1 // pred_region
      %s26 = ssub.s32 512, 512
      %27 = vsyncadd [#allocation6], %s26
      %s28 = sshll.u32 [#allocation5], 4
      %s29 = int_to_ptr.vmem [resolvable:$true] %s28
      %34 = dma.hbm_to_vmem [thread:$0]  %s1, 512, %s29, [#allocation6], 128, 128, 8
    $region9: #{tpu_custom_call.1} parent=1 // pred_fallthru
      _
    // Predicated region
    $region10: #{tpu_custom_call.1} parent=1 // pred_check
      _
    $region11: #{tpu_custom_call.1} parent=1 // pred_check_branch
      %36 = sbr.rel (0) target = $region13
    $region12: #{tpu_custom_call.1} parent=1 // pred_region
      _
    $region13: #{tpu_custom_call.1} parent=1 // pred_fallthru
      _
    // Predicated region
    $region14: #{tpu_custom_call.1} parent=1 // pred_check
      _
    $region15: #{tpu_custom_call.1} parent=1 // pred_check_branch
      %38 = sbr.rel (0) target = $region17
    $region16: #{tpu_custom_call.1} parent=1 // pred_region
      %39 = dma.done [#allocation3], 256
    $region17: #{tpu_custom_call.1} parent=1 // pred_fallthru
      _
    // Predicated region
    $region18: #{tpu_custom_call.1} parent=1 // pred_check
      _
    $region19: #{tpu_custom_call.1} parent=1 // pred_check_branch
      %41 = sbr.rel (0) target = $region21
    $region20: #{tpu_custom_call.1} parent=1 // pred_region
      %42 = dma.done [#allocation6], 512
    $region21: #{tpu_custom_call.1} parent=1 // pred_fallthru
      _
    %v43 = vld [vmem:[#allocation2] sm:$0xff]
    %v44 = vld [vmem:[#allocation2 + $0x8] sm:$0xff]
    %v45 = vld [vmem:[#allocation5] sm:$0xff]
    %v46 = vld [vmem:[#allocation5 + $0x8] sm:$0xff]
    %v47 = vld [vmem:[#allocation5 + $0x10] sm:$0xff]
    %v48 = vld [vmem:[#allocation5 + $0x18] sm:$0xff]
    %v49 = vld [vmem:[%s2] sm:$0x1]
    %v51 = vlaneseq
    %v52 = vshrl.u32 %v51, 7
    %v53 = vsub.s32 0, %v52
    %v54 = vrot.slane %v49, %v53
    %vm56 = vcmask 261120
    %v58 = vsel %vm56, %v43, 0
    %v61 = vsel %vm56, %v44, 0
    %63 = vmatprep.subr.mxu0 0.0
    %64 = vmatpush1.msra.mxu0 %v45
    %65 = vmatprep.subr.mxu0 0.0
    %66 = vmatpush1.msra.mxu0 %v46
    %67 = vmatprep.subr.mxu0 0.0
    %68 = vmatpush1.msra.mxu0 %v47
    %69 = vmatprep.subr.mxu0 0.0
    %70 = vmatpush1.msra.mxu0 %v48
    %71 = vmatprep.subr.mxu0 0.0
    %72 = vmatpush1.msra.mxu0 0.0
    %73 = vmatprep.subr.mxu0 0.0
    %74 = vmatpush1.msra.mxu0 0.0
    %75 = vmatprep.subr.mxu0 0.0
    %76 = vmatpush1.msra.mxu0 0.0
    %77 = vmatprep.subr.mxu0 0.0
    %78 = vmatpush1.msra.mxu0 0.0
    %79 = vmatprep.subr.mxu0 0.0
    %80 = vmatpush1.msra.mxu0 0.0
    %81 = vmatprep.subr.mxu0 0.0
    %82 = vmatpush1.msra.mxu0 0.0
    %83 = vmatprep.subr.mxu0 0.0
    %84 = vmatpush1.msra.mxu0 0.0
    %85 = vmatprep.subr.mxu0 0.0
    %86 = vmatpush1.msra.mxu0 0.0
    %87 = vmatprep.subr.mxu0 0.0
    %88 = vmatpush1.msra.mxu0 0.0
    %89 = vmatprep.subr.mxu0 0.0
    %90 = vmatpush1.msra.mxu0 0.0
    %91 = vmatprep.subr.mxu0 0.0
    %92 = vmatpush1.msra.mxu0 0.0
    %93 = vmatprep.subr.mxu0 0.0
    %94 = vmatpush1.msra.mxu0 0.0
    %95 = vmatprep.subr.mxu0 0.0
    %96 = vmatpush1.msra.mxu0 0.0
    %97 = vmatprep.subr.mxu0 0.0
    %98 = vmatpush1.msra.mxu0 0.0
    %99 = vmatprep.subr.mxu0 0.0
    %100 = vmatpush1.msra.mxu0 0.0
    %101 = vmatprep.subr.mxu0 0.0
    %102 = vmatpush1.msra.mxu0 0.0
    %103 = vmatprep.subr.mxu0 0.0
    %104 = vmatpush1.msra.mxu0 0.0
    %105 = vmatprep.subr.mxu0 0.0
    %106 = vmatpush1.msra.mxu0 0.0
    %107 = vmatprep.subr.mxu0 0.0
    %108 = vmatpush1.msra.mxu0 0.0
    %109 = vmatprep.subr.mxu0 0.0
    %110 = vmatpush1.msra.mxu0 0.0
    %111 = vmatprep.subr.mxu0 0.0
    %112 = vmatpush1.msra.mxu0 0.0
    %113 = vmatprep.subr.mxu0 0.0
    %114 = vmatpush1.msra.mxu0 0.0
    %115 = vmatprep.subr.mxu0 0.0
    %116 = vmatpush1.msra.mxu0 0.0
    %117 = vmatprep.subr.mxu0 0.0
    %118 = vmatpush1.msra.mxu0 0.0
    %119 = vmatprep.subr.mxu0 0.0
    %120 = vmatpush1.msra.mxu0 0.0
    %121 = vmatprep.subr.mxu0 0.0
    %122 = vmatpush1.msra.mxu0 0.0
    %123 = vmatprep.subr.mxu0 0.0
    %124 = vmatpush1.msra.mxu0 0.0
    %125 = vmatprep.subr.mxu0 0.0
    %126 = vmatpush1.msra.mxu0 0.0
    %127 = vmatprep.mubr.f32.mxu0 0.0
    %128 = vmatmul.mubr.f32.gmra.mrb[0].mxu0 %v58
    %v129 = vpop.f32.mrb[0].mxu0
    %v130 = vadd.f32 %v54, %v129
    %v131 = vpop.f32.mrb[0].mxu0
    %132 = vmatprep.mubr.f32.mxu0 0.0
    %133 = vmatmul.mubr.f32.gmra.mrb[0].mxu0 %v61
    %v134 = vpop.f32.mrb[0].mxu0
    %v135 = vadd.f32 %v54, %v134
    %v136 = vpop.f32.mrb[0].mxu0
    %137 = vdwg.mxu0
    %139 = vrot.lane.b32.xlu0 %v130, 96
    %v140 = vpop.permute.xlu0 %139
    %vm141 = vcmask 130048
    %v142 = vsel %vm141, %v130, 0
    %v144 = vsel %vm141, %v140, 0
    %146 = vmatprep.subr.mxu0 0.0
    %147 = vmatpush1.xpose.msra.mxu0 %v144
    %148 = vmatprep.subr.mxu0 0.0
    %149 = vmatpush1.xpose.msra.mxu0 0.0
    %150 = vmatprep.subr.mxu0 0.0
    %151 = vmatpush1.xpose.msra.mxu0 0.0
    %152 = vmatprep.subr.mxu0 0.0
    %153 = vmatpush1.xpose.msra.mxu0 0.0
    %154 = vmatprep.subr.mxu0 0.0
    %155 = vmatpush1.xpose.msra.mxu0 0.0
    %156 = vmatprep.subr.mxu0 0.0
    %157 = vmatpush1.xpose.msra.mxu0 0.0
    %158 = vmatprep.subr.mxu0 0.0
    %159 = vmatpush1.xpose.msra.mxu0 0.0
    %160 = vmatprep.subr.mxu0 0.0
    %161 = vmatpush1.xpose.msra.mxu0 0.0
    %162 = vmatprep.subr.mxu0 0.0
    %163 = vmatpush1.xpose.msra.mxu0 0.0
    %164 = vmatprep.subr.mxu0 0.0
    %165 = vmatpush1.xpose.msra.mxu0 0.0
    %166 = vmatprep.subr.mxu0 0.0
    %167 = vmatpush1.xpose.msra.mxu0 0.0
    %168 = vmatprep.subr.mxu0 0.0
    %169 = vmatpush1.xpose.msra.mxu0 0.0
    %170 = vmatprep.subr.mxu0 0.0
    %171 = vmatpush1.xpose.msra.mxu0 0.0
    %172 = vmatprep.subr.mxu0 0.0
    %173 = vmatpush1.xpose.msra.mxu0 0.0
    %174 = vmatprep.subr.mxu0 0.0
    %175 = vmatpush1.xpose.msra.mxu0 0.0
    %176 = vmatprep.subr.mxu0 0.0
    %177 = vmatpush1.xpose.msra.mxu0 0.0
    %178 = vmatprep.subr.mxu0 0.0
    %179 = vmatpush1.xpose.msra.mxu0 0.0
    %180 = vmatprep.subr.mxu0 0.0
    %181 = vmatpush1.xpose.msra.mxu0 0.0
    %182 = vmatprep.subr.mxu0 0.0
    %183 = vmatpush1.xpose.msra.mxu0 0.0
    %184 = vmatprep.subr.mxu0 0.0
    %185 = vmatpush1.xpose.msra.mxu0 0.0
    %186 = vmatprep.subr.mxu0 0.0
    %187 = vmatpush1.xpose.msra.mxu0 0.0
    %188 = vmatprep.subr.mxu0 0.0
    %189 = vmatpush1.xpose.msra.mxu0 0.0
    %190 = vmatprep.subr.mxu0 0.0
    %191 = vmatpush1.xpose.msra.mxu0 0.0
    %192 = vmatprep.subr.mxu0 0.0
    %193 = vmatpush1.xpose.msra.mxu0 0.0
    %194 = vmatprep.subr.mxu0 0.0
    %195 = vmatpush1.xpose.msra.mxu0 0.0
    %196 = vmatprep.subr.mxu0 0.0
    %197 = vmatpush1.xpose.msra.mxu0 0.0
    %198 = vmatprep.subr.mxu0 0.0
    %199 = vmatpush1.xpose.msra.mxu0 0.0
    %200 = vmatprep.subr.mxu0 0.0
    %201 = vmatpush1.xpose.msra.mxu0 0.0
    %202 = vmatprep.subr.mxu0 0.0
    %203 = vmatpush1.xpose.msra.mxu0 0.0
    %204 = vmatprep.subr.mxu0 0.0
    %205 = vmatpush1.xpose.msra.mxu0 0.0
    %206 = vmatprep.subr.mxu0 0.0
    %207 = vmatpush1.xpose.msra.mxu0 0.0
    %208 = vmatprep.subr.mxu0 0.0
    %209 = vmatpush1.xpose.msra.mxu0 0.0
    %210 = vmatprep.mubr.f32.mxu0 0.0
    %211 = vmatmul.mubr.f32.gmra.mrb[0].mxu0 %v142
    %v212 = vpop.f32.mrb[0].mxu0
    %v213 = vadd.f32 0.0, %v212
    %v214 = vpop.f32.mrb[0].mxu0
    %215 = vdwg.mxu0
    %217 = vrot.lane.b32.xlu0 %v135, 96
    %v218 = vpop.permute.xlu0 %217
    %v219 = vsel %vm141, %v135, 0
    %v221 = vsel %vm141, %v218, 0
    %223 = vmatprep.subr.mxu0 0.0
    %224 = vmatpush1.xpose.msra.mxu0 %v221
    %225 = vmatprep.subr.mxu0 0.0
    %226 = vmatpush1.xpose.msra.mxu0 0.0
    %227 = vmatprep.subr.mxu0 0.0
    %228 = vmatpush1.xpose.msra.mxu0 0.0
    %229 = vmatprep.subr.mxu0 0.0
    %230 = vmatpush1.xpose.msra.mxu0 0.0
    %231 = vmatprep.subr.mxu0 0.0
    %232 = vmatpush1.xpose.msra.mxu0 0.0
    %233 = vmatprep.subr.mxu0 0.0
    %234 = vmatpush1.xpose.msra.mxu0 0.0
    %235 = vmatprep.subr.mxu0 0.0
    %236 = vmatpush1.xpose.msra.mxu0 0.0
    %237 = vmatprep.subr.mxu0 0.0
    %238 = vmatpush1.xpose.msra.mxu0 0.0
    %239 = vmatprep.subr.mxu0 0.0
    %240 = vmatpush1.xpose.msra.mxu0 0.0
    %241 = vmatprep.subr.mxu0 0.0
    %242 = vmatpush1.xpose.msra.mxu0 0.0
    %243 = vmatprep.subr.mxu0 0.0
    %244 = vmatpush1.xpose.msra.mxu0 0.0
    %245 = vmatprep.subr.mxu0 0.0
    %246 = vmatpush1.xpose.msra.mxu0 0.0
    %247 = vmatprep.subr.mxu0 0.0
    %248 = vmatpush1.xpose.msra.mxu0 0.0
    %249 = vmatprep.subr.mxu0 0.0
    %250 = vmatpush1.xpose.msra.mxu0 0.0
    %251 = vmatprep.subr.mxu0 0.0
    %252 = vmatpush1.xpose.msra.mxu0 0.0
    %253 = vmatprep.subr.mxu0 0.0
    %254 = vmatpush1.xpose.msra.mxu0 0.0
    %255 = vmatprep.subr.mxu0 0.0
    %256 = vmatpush1.xpose.msra.mxu0 0.0
    %257 = vmatprep.subr.mxu0 0.0
    %258 = vmatpush1.xpose.msra.mxu0 0.0
    %259 = vmatprep.subr.mxu0 0.0
    %260 = vmatpush1.xpose.msra.mxu0 0.0
    %261 = vmatprep.subr.mxu0 0.0
    %262 = vmatpush1.xpose.msra.mxu0 0.0
    %263 = vmatprep.subr.mxu0 0.0
    %264 = vmatpush1.xpose.msra.mxu0 0.0
    %265 = vmatprep.subr.mxu0 0.0
    %266 = vmatpush1.xpose.msra.mxu0 0.0
    %267 = vmatprep.subr.mxu0 0.0
    %268 = vmatpush1.xpose.msra.mxu0 0.0
    %269 = vmatprep.subr.mxu0 0.0
    %270 = vmatpush1.xpose.msra.mxu0 0.0
    %271 = vmatprep.subr.mxu0 0.0
    %272 = vmatpush1.xpose.msra.mxu0 0.0
    %273 = vmatprep.subr.mxu0 0.0
    %274 = vmatpush1.xpose.msra.mxu0 0.0
    %275 = vmatprep.subr.mxu0 0.0
    %276 = vmatpush1.xpose.msra.mxu0 0.0
    %277 = vmatprep.subr.mxu0 0.0
    %278 = vmatpush1.xpose.msra.mxu0 0.0
    %279 = vmatprep.subr.mxu0 0.0
    %280 = vmatpush1.xpose.msra.mxu0 0.0
    %281 = vmatprep.subr.mxu0 0.0
    %282 = vmatpush1.xpose.msra.mxu0 0.0
    %283 = vmatprep.subr.mxu0 0.0
    %284 = vmatpush1.xpose.msra.mxu0 0.0
    %285 = vmatprep.subr.mxu0 0.0
    %286 = vmatpush1.xpose.msra.mxu0 0.0
    %287 = vmatprep.mubr.f32.mxu0 0.0
    %288 = vmatmul.mubr.f32.gmra.mrb[0].mxu0 %v219
    %v289 = vpop.f32.mrb[0].mxu0
    %v290 = vadd.f32 0.0, %v289
    %v291 = vpop.f32.mrb[0].mxu0
    %292 = vdwg.mxu0
    %vm293 = vcmask 64512
    %v294 = vsel %vm293, %v213, -inf
    %295 = vmax.xlane.f32.xlu0 %v294
    %v296 = vpop.xlane.xlu0 %295
    %v297 = vsel %vm293, %v290, -inf
    %298 = vmax.xlane.f32.xlu0 %v297
    %v299 = vpop.xlane.xlu0 %298
    %v300 = vsub.f32 %v213, %v296
    %v301 = vsub.f32 %v290, %v299
    %v302 = vmul.f32 %v300, 1.442695
    %v303 = vpow.pop %v302
    %v304 = vmul.f32 %v301, 1.442695
    %v305 = vpow.pop %v304
    %v306 = vsel %vm293, %v303, 0.0
    %307 = vadd.xlane.f32.xlu0 %v306
    %v308 = vpop.xlane.xlu0 %307
    %v309 = vsel %vm293, %v305, 0.0
    %310 = vadd.xlane.f32.xlu0 %v309
    %v311 = vpop.xlane.xlu0 %310
    %v312 = vrcp.pop %v308
    %v313 = vrcp.pop %v311
    %v314 = vmul.f32 %v308, %v312
    %v315 = vmul.f32 %v311, %v313
    %v316 = vsub.f32 2.0, %v314
    %v317 = vsub.f32 2.0, %v315
    %v318 = vmul.f32 %v312, %v316
    %v319 = vmul.f32 %v313, %v317
    %v320 = vmul.f32 %v303, %v318
    %v321 = vmul.f32 %v305, %v319
    %322 = vrot.lane.b32.xlu0 %v130, 64
    %v323 = vpop.permute.xlu0 %322
    %v326 = vsel %vm293, %v320, 0
    %328 = vmatprep.subr.mxu0 0.0
    %329 = vmatpush1.msra.mxu0 %v323
    %330 = vmatprep.subr.mxu0 0.0
    %331 = vmatpush1.msra.mxu0 0.0
    %332 = vmatprep.subr.mxu0 0.0
    %333 = vmatpush1.msra.mxu0 0.0
    %334 = vmatprep.subr.mxu0 0.0
    %335 = vmatpush1.msra.mxu0 0.0
    %336 = vmatprep.subr.mxu0 0.0
    %337 = vmatpush1.msra.mxu0 0.0
    %338 = vmatprep.subr.mxu0 0.0
    %339 = vmatpush1.msra.mxu0 0.0
    %340 = vmatprep.subr.mxu0 0.0
    %341 = vmatpush1.msra.mxu0 0.0
    %342 = vmatprep.subr.mxu0 0.0
    %343 = vmatpush1.msra.mxu0 0.0
    %344 = vmatprep.subr.mxu0 0.0
    %345 = vmatpush1.msra.mxu0 0.0
    %346 = vmatprep.subr.mxu0 0.0
    %347 = vmatpush1.msra.mxu0 0.0
    %348 = vmatprep.subr.mxu0 0.0
    %349 = vmatpush1.msra.mxu0 0.0
    %350 = vmatprep.subr.mxu0 0.0
    %351 = vmatpush1.msra.mxu0 0.0
    %352 = vmatprep.subr.mxu0 0.0
    %353 = vmatpush1.msra.mxu0 0.0
    %354 = vmatprep.subr.mxu0 0.0
    %355 = vmatpush1.msra.mxu0 0.0
    %356 = vmatprep.subr.mxu0 0.0
    %357 = vmatpush1.msra.mxu0 0.0
    %358 = vmatprep.subr.mxu0 0.0
    %359 = vmatpush1.msra.mxu0 0.0
    %360 = vmatprep.subr.mxu0 0.0
    %361 = vmatpush1.msra.mxu0 0.0
    %362 = vmatprep.subr.mxu0 0.0
    %363 = vmatpush1.msra.mxu0 0.0
    %364 = vmatprep.subr.mxu0 0.0
    %365 = vmatpush1.msra.mxu0 0.0
    %366 = vmatprep.subr.mxu0 0.0
    %367 = vmatpush1.msra.mxu0 0.0
    %368 = vmatprep.subr.mxu0 0.0
    %369 = vmatpush1.msra.mxu0 0.0
    %370 = vmatprep.subr.mxu0 0.0
    %371 = vmatpush1.msra.mxu0 0.0
    %372 = vmatprep.subr.mxu0 0.0
    %373 = vmatpush1.msra.mxu0 0.0
    %374 = vmatprep.subr.mxu0 0.0
    %375 = vmatpush1.msra.mxu0 0.0
    %376 = vmatprep.subr.mxu0 0.0
    %377 = vmatpush1.msra.mxu0 0.0
    %378 = vmatprep.subr.mxu0 0.0
    %379 = vmatpush1.msra.mxu0 0.0
    %380 = vmatprep.subr.mxu0 0.0
    %381 = vmatpush1.msra.mxu0 0.0
    %382 = vmatprep.subr.mxu0 0.0
    %383 = vmatpush1.msra.mxu0 0.0
    %384 = vmatprep.subr.mxu0 0.0
    %385 = vmatpush1.msra.mxu0 0.0
    %386 = vmatprep.subr.mxu0 0.0
    %387 = vmatpush1.msra.mxu0 0.0
    %388 = vmatprep.subr.mxu0 0.0
    %389 = vmatpush1.msra.mxu0 0.0
    %390 = vmatprep.subr.mxu0 0.0
    %391 = vmatpush1.msra.mxu0 0.0
    %392 = vmatprep.mubr.f32.mxu0 0.0
    %393 = vmatmul.mubr.f32.gmra.mrb[0].mxu0 %v326
    %v394 = vpop.f32.mrb[0].mxu0
    %v395 = vadd.f32 0.0, %v394
    %v396 = vpop.f32.mrb[0].mxu0
    %397 = vdwg.mxu0
    %398 = vrot.lane.b32.xlu0 %v135, 64
    %v399 = vpop.permute.xlu0 %398
    %v402 = vsel %vm293, %v321, 0
    %404 = vmatprep.subr.mxu0 0.0
    %405 = vmatpush1.msra.mxu0 %v399
    %406 = vmatprep.subr.mxu0 0.0
    %407 = vmatpush1.msra.mxu0 0.0
    %408 = vmatprep.subr.mxu0 0.0
    %409 = vmatpush1.msra.mxu0 0.0
    %410 = vmatprep.subr.mxu0 0.0
    %411 = vmatpush1.msra.mxu0 0.0
    %412 = vmatprep.subr.mxu0 0.0
    %413 = vmatpush1.msra.mxu0 0.0
    %414 = vmatprep.subr.mxu0 0.0
    %415 = vmatpush1.msra.mxu0 0.0
    %416 = vmatprep.subr.mxu0 0.0
    %417 = vmatpush1.msra.mxu0 0.0
    %418 = vmatprep.subr.mxu0 0.0
    %419 = vmatpush1.msra.mxu0 0.0
    %420 = vmatprep.subr.mxu0 0.0
    %421 = vmatpush1.msra.mxu0 0.0
    %422 = vmatprep.subr.mxu0 0.0
    %423 = vmatpush1.msra.mxu0 0.0
    %424 = vmatprep.subr.mxu0 0.0
    %425 = vmatpush1.msra.mxu0 0.0
    %426 = vmatprep.subr.mxu0 0.0
    %427 = vmatpush1.msra.mxu0 0.0
    %428 = vmatprep.subr.mxu0 0.0
    %429 = vmatpush1.msra.mxu0 0.0
    %430 = vmatprep.subr.mxu0 0.0
    %431 = vmatpush1.msra.mxu0 0.0
    %432 = vmatprep.subr.mxu0 0.0
    %433 = vmatpush1.msra.mxu0 0.0
    %434 = vmatprep.subr.mxu0 0.0
    %435 = vmatpush1.msra.mxu0 0.0
    %436 = vmatprep.subr.mxu0 0.0
    %437 = vmatpush1.msra.mxu0 0.0
    %438 = vmatprep.subr.mxu0 0.0
    %439 = vmatpush1.msra.mxu0 0.0
    %440 = vmatprep.subr.mxu0 0.0
    %441 = vmatpush1.msra.mxu0 0.0
    %442 = vmatprep.subr.mxu0 0.0
    %443 = vmatpush1.msra.mxu0 0.0
    %444 = vmatprep.subr.mxu0 0.0
    %445 = vmatpush1.msra.mxu0 0.0
    %446 = vmatprep.subr.mxu0 0.0
    %447 = vmatpush1.msra.mxu0 0.0
    %448 = vmatprep.subr.mxu0 0.0
    %449 = vmatpush1.msra.mxu0 0.0
    %450 = vmatprep.subr.mxu0 0.0
    %451 = vmatpush1.msra.mxu0 0.0
    %452 = vmatprep.subr.mxu0 0.0
    %453 = vmatpush1.msra.mxu0 0.0
    %454 = vmatprep.subr.mxu0 0.0
    %455 = vmatpush1.msra.mxu0 0.0
    %456 = vmatprep.subr.mxu0 0.0
    %457 = vmatpush1.msra.mxu0 0.0
    %458 = vmatprep.subr.mxu0 0.0
    %459 = vmatpush1.msra.mxu0 0.0
    %460 = vmatprep.subr.mxu0 0.0
    %461 = vmatpush1.msra.mxu0 0.0
    %462 = vmatprep.subr.mxu0 0.0
    %463 = vmatpush1.msra.mxu0 0.0
    %464 = vmatprep.subr.mxu0 0.0
    %465 = vmatpush1.msra.mxu0 0.0
    %466 = vmatprep.subr.mxu0 0.0
    %467 = vmatpush1.msra.mxu0 0.0
    %468 = vmatprep.mubr.f32.mxu0 0.0
    %469 = vmatmul.mubr.f32.gmra.mrb[0].mxu0 %v402
    %v470 = vpop.f32.mrb[0].mxu0
    %v471 = vadd.f32 0.0, %v470
    %v472 = vpop.f32.mrb[0].mxu0
    %473 = vdwg.mxu0
    %474 = vst.msk [vmem:[#allocation7] sm:$0xff] %vm141, %v395
    %475 = vst.msk [vmem:[#allocation7 + $0x8] sm:$0xff] %vm141, %v471
    %476 = vrot.lane.b32.xlu0 %v130, 112
    %v477 = vpop.permute.xlu0 %476
    %478 = vrot.lane.b32.xlu0 %v130, 80
    %v479 = vpop.permute.xlu0 %478
    %v480 = vsel %vm141, %v477, 0
    %v482 = vsel %vm141, %v479, 0
    %484 = vmatprep.subr.mxu0 0.0
    %485 = vmatpush1.xpose.msra.mxu0 %v482
    %486 = vmatprep.subr.mxu0 0.0
    %487 = vmatpush1.xpose.msra.mxu0 0.0
    %488 = vmatprep.subr.mxu0 0.0
    %489 = vmatpush1.xpose.msra.mxu0 0.0
    %490 = vmatprep.subr.mxu0 0.0
    %491 = vmatpush1.xpose.msra.mxu0 0.0
    %492 = vmatprep.subr.mxu0 0.0
    %493 = vmatpush1.xpose.msra.mxu0 0.0
    %494 = vmatprep.subr.mxu0 0.0
    %495 = vmatpush1.xpose.msra.mxu0 0.0
    %496 = vmatprep.subr.mxu0 0.0
    %497 = vmatpush1.xpose.msra.mxu0 0.0
    %498 = vmatprep.subr.mxu0 0.0
    %499 = vmatpush1.xpose.msra.mxu0 0.0
    %500 = vmatprep.subr.mxu0 0.0
    %501 = vmatpush1.xpose.msra.mxu0 0.0
    %502 = vmatprep.subr.mxu0 0.0
    %503 = vmatpush1.xpose.msra.mxu0 0.0
    %504 = vmatprep.subr.mxu0 0.0
    %505 = vmatpush1.xpose.msra.mxu0 0.0
    %506 = vmatprep.subr.mxu0 0.0
    %507 = vmatpush1.xpose.msra.mxu0 0.0
    %508 = vmatprep.subr.mxu0 0.0
    %509 = vmatpush1.xpose.msra.mxu0 0.0
    %510 = vmatprep.subr.mxu0 0.0
    %511 = vmatpush1.xpose.msra.mxu0 0.0
    %512 = vmatprep.subr.mxu0 0.0
    %513 = vmatpush1.xpose.msra.mxu0 0.0
    %514 = vmatprep.subr.mxu0 0.0
    %515 = vmatpush1.xpose.msra.mxu0 0.0
    %516 = vmatprep.subr.mxu0 0.0
    %517 = vmatpush1.xpose.msra.mxu0 0.0
    %518 = vmatprep.subr.mxu0 0.0
    %519 = vmatpush1.xpose.msra.mxu0 0.0
    %520 = vmatprep.subr.mxu0 0.0
    %521 = vmatpush1.xpose.msra.mxu0 0.0
    %522 = vmatprep.subr.mxu0 0.0
    %523 = vmatpush1.xpose.msra.mxu0 0.0
    %524 = vmatprep.subr.mxu0 0.0
    %525 = vmatpush1.xpose.msra.mxu0 0.0
    %526 = vmatprep.subr.mxu0 0.0
    %527 = vmatpush1.xpose.msra.mxu0 0.0
    %528 = vmatprep.subr.mxu0 0.0
    %529 = vmatpush1.xpose.msra.mxu0 0.0
    %530 = vmatprep.subr.mxu0 0.0
    %531 = vmatpush1.xpose.msra.mxu0 0.0
    %532 = vmatprep.subr.mxu0 0.0
    %533 = vmatpush1.xpose.msra.mxu0 0.0
    %534 = vmatprep.subr.mxu0 0.0
    %535 = vmatpush1.xpose.msra.mxu0 0.0
    %536 = vmatprep.subr.mxu0 0.0
    %537 = vmatpush1.xpose.msra.mxu0 0.0
    %538 = vmatprep.subr.mxu0 0.0
    %539 = vmatpush1.xpose.msra.mxu0 0.0
    %540 = vmatprep.subr.mxu0 0.0
    %541 = vmatpush1.xpose.msra.mxu0 0.0
    %542 = vmatprep.subr.mxu0 0.0
    %543 = vmatpush1.xpose.msra.mxu0 0.0
    %544 = vmatprep.subr.mxu0 0.0
    %545 = vmatpush1.xpose.msra.mxu0 0.0
    %546 = vmatprep.subr.mxu0 0.0
    %547 = vmatpush1.xpose.msra.mxu0 0.0
    %548 = vmatprep.mubr.f32.mxu0 0.0
    %549 = vmatmul.mubr.f32.gmra.mrb[0].mxu0 %v480
    %v550 = vpop.f32.mrb[0].mxu0
    %v551 = vadd.f32 0.0, %v550
    %v552 = vpop.f32.mrb[0].mxu0
    %553 = vdwg.mxu0
    %554 = vrot.lane.b32.xlu0 %v135, 112
    %v555 = vpop.permute.xlu0 %554
    %556 = vrot.lane.b32.xlu0 %v135, 80
    %v557 = vpop.permute.xlu0 %556
    %v558 = vsel %vm141, %v555, 0
    %v560 = vsel %vm141, %v557, 0
    %562 = vmatprep.subr.mxu0 0.0
    %563 = vmatpush1.xpose.msra.mxu0 %v560
    %564 = vmatprep.subr.mxu0 0.0
    %565 = vmatpush1.xpose.msra.mxu0 0.0
    %566 = vmatprep.subr.mxu0 0.0
    %567 = vmatpush1.xpose.msra.mxu0 0.0
    %568 = vmatprep.subr.mxu0 0.0
    %569 = vmatpush1.xpose.msra.mxu0 0.0
    %570 = vmatprep.subr.mxu0 0.0
    %571 = vmatpush1.xpose.msra.mxu0 0.0
    %572 = vmatprep.subr.mxu0 0.0
    %573 = vmatpush1.xpose.msra.mxu0 0.0
    %574 = vmatprep.subr.mxu0 0.0
    %575 = vmatpush1.xpose.msra.mxu0 0.0
    %576 = vmatprep.subr.mxu0 0.0
    %577 = vmatpush1.xpose.msra.mxu0 0.0
    %578 = vmatprep.subr.mxu0 0.0
    %579 = vmatpush1.xpose.msra.mxu0 0.0
    %580 = vmatprep.subr.mxu0 0.0
    %581 = vmatpush1.xpose.msra.mxu0 0.0
    %582 = vmatprep.subr.mxu0 0.0
    %583 = vmatpush1.xpose.msra.mxu0 0.0
    %584 = vmatprep.subr.mxu0 0.0
    %585 = vmatpush1.xpose.msra.mxu0 0.0
    %586 = vmatprep.subr.mxu0 0.0
    %587 = vmatpush1.xpose.msra.mxu0 0.0
    %588 = vmatprep.subr.mxu0 0.0
    %589 = vmatpush1.xpose.msra.mxu0 0.0
    %590 = vmatprep.subr.mxu0 0.0
    %591 = vmatpush1.xpose.msra.mxu0 0.0
    %592 = vmatprep.subr.mxu0 0.0
    %593 = vmatpush1.xpose.msra.mxu0 0.0
    %594 = vmatprep.subr.mxu0 0.0
    %595 = vmatpush1.xpose.msra.mxu0 0.0
    %596 = vmatprep.subr.mxu0 0.0
    %597 = vmatpush1.xpose.msra.mxu0 0.0
    %598 = vmatprep.subr.mxu0 0.0
    %599 = vmatpush1.xpose.msra.mxu0 0.0
    %600 = vmatprep.subr.mxu0 0.0
    %601 = vmatpush1.xpose.msra.mxu0 0.0
    %602 = vmatprep.subr.mxu0 0.0
    %603 = vmatpush1.xpose.msra.mxu0 0.0
    %604 = vmatprep.subr.mxu0 0.0
    %605 = vmatpush1.xpose.msra.mxu0 0.0
    %606 = vmatprep.subr.mxu0 0.0
    %607 = vmatpush1.xpose.msra.mxu0 0.0
    %608 = vmatprep.subr.mxu0 0.0
    %609 = vmatpush1.xpose.msra.mxu0 0.0
    %610 = vmatprep.subr.mxu0 0.0
    %611 = vmatpush1.xpose.msra.mxu0 0.0
    %612 = vmatprep.subr.mxu0 0.0
    %613 = vmatpush1.xpose.msra.mxu0 0.0
    %614 = vmatprep.subr.mxu0 0.0
    %615 = vmatpush1.xpose.msra.mxu0 0.0
    %616 = vmatprep.subr.mxu0 0.0
    %617 = vmatpush1.xpose.msra.mxu0 0.0
    %618 = vmatprep.subr.mxu0 0.0
    %619 = vmatpush1.xpose.msra.mxu0 0.0
    %620 = vmatprep.subr.mxu0 0.0
    %621 = vmatpush1.xpose.msra.mxu0 0.0
    %622 = vmatprep.subr.mxu0 0.0
    %623 = vmatpush1.xpose.msra.mxu0 0.0
    %624 = vmatprep.subr.mxu0 0.0
    %625 = vmatpush1.xpose.msra.mxu0 0.0
    %626 = vmatprep.mubr.f32.mxu0 0.0
    %627 = vmatmul.mubr.f32.gmra.mrb[0].mxu0 %v558
    %v628 = vpop.f32.mrb[0].mxu0
    %v629 = vadd.f32 0.0, %v628
    %v630 = vpop.f32.mrb[0].mxu0
    %631 = vdwg.mxu0
    %v632 = vsel %vm293, %v551, -inf
    %633 = vmax.xlane.f32.xlu0 %v632
    %v634 = vpop.xlane.xlu0 %633
    %v635 = vsel %vm293, %v629, -inf
    %636 = vmax.xlane.f32.xlu0 %v635
    %v637 = vpop.xlane.xlu0 %636
    %v638 = vsub.f32 %v551, %v634
    %v639 = vsub.f32 %v629, %v637
    %v640 = vmul.f32 %v638, 1.442695
    %v641 = vpow.pop %v640
    %v642 = vmul.f32 %v639, 1.442695
    %v643 = vpow.pop %v642
    %v644 = vsel %vm293, %v641, 0.0
    %645 = vadd.xlane.f32.xlu0 %v644
    %v646 = vpop.xlane.xlu0 %645
    %v647 = vsel %vm293, %v643, 0.0
    %648 = vadd.xlane.f32.xlu0 %v647
    %v649 = vpop.xlane.xlu0 %648
    %v650 = vrcp.pop %v646
    %v651 = vrcp.pop %v649
    %v652 = vmul.f32 %v646, %v650
    %v653 = vmul.f32 %v649, %v651
    %v654 = vsub.f32 2.0, %v652
    %v655 = vsub.f32 2.0, %v653
    %v656 = vmul.f32 %v650, %v654
    %v657 = vmul.f32 %v651, %v655
    %v658 = vmul.f32 %v641, %v656
    %v659 = vmul.f32 %v643, %v657
    %660 = vrot.lane.b32.xlu0 %v130, 48
    %v661 = vpop.permute.xlu0 %660
    %v664 = vsel %vm293, %v658, 0
    %666 = vmatprep.subr.mxu0 0.0
    %667 = vmatpush1.msra.mxu0 %v661
    %668 = vmatprep.subr.mxu0 0.0
    %669 = vmatpush1.msra.mxu0 0.0
    %670 = vmatprep.subr.mxu0 0.0
    %671 = vmatpush1.msra.mxu0 0.0
    %672 = vmatprep.subr.mxu0 0.0
    %673 = vmatpush1.msra.mxu0 0.0
    %674 = vmatprep.subr.mxu0 0.0
    %675 = vmatpush1.msra.mxu0 0.0
    %676 = vmatprep.subr.mxu0 0.0
    %677 = vmatpush1.msra.mxu0 0.0
    %678 = vmatprep.subr.mxu0 0.0
    %679 = vmatpush1.msra.mxu0 0.0
    %680 = vmatprep.subr.mxu0 0.0
    %681 = vmatpush1.msra.mxu0 0.0
    %682 = vmatprep.subr.mxu0 0.0
    %683 = vmatpush1.msra.mxu0 0.0
    %684 = vmatprep.subr.mxu0 0.0
    %685 = vmatpush1.msra.mxu0 0.0
    %686 = vmatprep.subr.mxu0 0.0
    %687 = vmatpush1.msra.mxu0 0.0
    %688 = vmatprep.subr.mxu0 0.0
    %689 = vmatpush1.msra.mxu0 0.0
    %690 = vmatprep.subr.mxu0 0.0
    %691 = vmatpush1.msra.mxu0 0.0
    %692 = vmatprep.subr.mxu0 0.0
    %693 = vmatpush1.msra.mxu0 0.0
    %694 = vmatprep.subr.mxu0 0.0
    %695 = vmatpush1.msra.mxu0 0.0
    %696 = vmatprep.subr.mxu0 0.0
    %697 = vmatpush1.msra.mxu0 0.0
    %698 = vmatprep.subr.mxu0 0.0
    %699 = vmatpush1.msra.mxu0 0.0
    %700 = vmatprep.subr.mxu0 0.0
    %701 = vmatpush1.msra.mxu0 0.0
    %702 = vmatprep.subr.mxu0 0.0
    %703 = vmatpush1.msra.mxu0 0.0
    %704 = vmatprep.subr.mxu0 0.0
    %705 = vmatpush1.msra.mxu0 0.0
    %706 = vmatprep.subr.mxu0 0.0
    %707 = vmatpush1.msra.mxu0 0.0
    %708 = vmatprep.subr.mxu0 0.0
    %709 = vmatpush1.msra.mxu0 0.0
    %710 = vmatprep.subr.mxu0 0.0
    %711 = vmatpush1.msra.mxu0 0.0
    %712 = vmatprep.subr.mxu0 0.0
    %713 = vmatpush1.msra.mxu0 0.0
    %714 = vmatprep.subr.mxu0 0.0
    %715 = vmatpush1.msra.mxu0 0.0
    %716 = vmatprep.subr.mxu0 0.0
    %717 = vmatpush1.msra.mxu0 0.0
    %718 = vmatprep.subr.mxu0 0.0
    %719 = vmatpush1.msra.mxu0 0.0
    %720 = vmatprep.subr.mxu0 0.0
    %721 = vmatpush1.msra.mxu0 0.0
    %722 = vmatprep.subr.mxu0 0.0
    %723 = vmatpush1.msra.mxu0 0.0
    %724 = vmatprep.subr.mxu0 0.0
    %725 = vmatpush1.msra.mxu0 0.0
    %726 = vmatprep.subr.mxu0 0.0
    %727 = vmatpush1.msra.mxu0 0.0
    %728 = vmatprep.subr.mxu0 0.0
    %729 = vmatpush1.msra.mxu0 0.0
    %730 = vmatprep.mubr.f32.mxu0 0.0
    %731 = vmatmul.mubr.f32.gmra.mrb[0].mxu0 %v664
    %v732 = vpop.f32.mrb[0].mxu0
    %v733 = vadd.f32 0.0, %v732
    %v734 = vpop.f32.mrb[0].mxu0
    %735 = vdwg.mxu0
    %736 = vrot.lane.b32.xlu0 %v135, 48
    %v737 = vpop.permute.xlu0 %736
    %v740 = vsel %vm293, %v659, 0
    %742 = vmatprep.subr.mxu0 0.0
    %743 = vmatpush1.msra.mxu0 %v737
    %744 = vmatprep.subr.mxu0 0.0
    %745 = vmatpush1.msra.mxu0 0.0
    %746 = vmatprep.subr.mxu0 0.0
    %747 = vmatpush1.msra.mxu0 0.0
    %748 = vmatprep.subr.mxu0 0.0
    %749 = vmatpush1.msra.mxu0 0.0
    %750 = vmatprep.subr.mxu0 0.0
    %751 = vmatpush1.msra.mxu0 0.0
    %752 = vmatprep.subr.mxu0 0.0
    %753 = vmatpush1.msra.mxu0 0.0
    %754 = vmatprep.subr.mxu0 0.0
    %755 = vmatpush1.msra.mxu0 0.0
    %756 = vmatprep.subr.mxu0 0.0
    %757 = vmatpush1.msra.mxu0 0.0
    %758 = vmatprep.subr.mxu0 0.0
    %759 = vmatpush1.msra.mxu0 0.0
    %760 = vmatprep.subr.mxu0 0.0
    %761 = vmatpush1.msra.mxu0 0.0
    %762 = vmatprep.subr.mxu0 0.0
    %763 = vmatpush1.msra.mxu0 0.0
    %764 = vmatprep.subr.mxu0 0.0
    %765 = vmatpush1.msra.mxu0 0.0
    %766 = vmatprep.subr.mxu0 0.0
    %767 = vmatpush1.msra.mxu0 0.0
    %768 = vmatprep.subr.mxu0 0.0
    %769 = vmatpush1.msra.mxu0 0.0
    %770 = vmatprep.subr.mxu0 0.0
    %771 = vmatpush1.msra.mxu0 0.0
    %772 = vmatprep.subr.mxu0 0.0
    %773 = vmatpush1.msra.mxu0 0.0
    %774 = vmatprep.subr.mxu0 0.0
    %775 = vmatpush1.msra.mxu0 0.0
    %776 = vmatprep.subr.mxu0 0.0
    %777 = vmatpush1.msra.mxu0 0.0
    %778 = vmatprep.subr.mxu0 0.0
    %779 = vmatpush1.msra.mxu0 0.0
    %780 = vmatprep.subr.mxu0 0.0
    %781 = vmatpush1.msra.mxu0 0.0
    %782 = vmatprep.subr.mxu0 0.0
    %783 = vmatpush1.msra.mxu0 0.0
    %784 = vmatprep.subr.mxu0 0.0
    %785 = vmatpush1.msra.mxu0 0.0
    %786 = vmatprep.subr.mxu0 0.0
    %787 = vmatpush1.msra.mxu0 0.0
    %788 = vmatprep.subr.mxu0 0.0
    %789 = vmatpush1.msra.mxu0 0.0
    %790 = vmatprep.subr.mxu0 0.0
    %791 = vmatpush1.msra.mxu0 0.0
    %792 = vmatprep.subr.mxu0 0.0
    %793 = vmatpush1.msra.mxu0 0.0
    %794 = vmatprep.subr.mxu0 0.0
    %795 = vmatpush1.msra.mxu0 0.0
    %796 = vmatprep.subr.mxu0 0.0
    %797 = vmatpush1.msra.mxu0 0.0
    %798 = vmatprep.subr.mxu0 0.0
    %799 = vmatpush1.msra.mxu0 0.0
    %800 = vmatprep.subr.mxu0 0.0
    %801 = vmatpush1.msra.mxu0 0.0
    %802 = vmatprep.subr.mxu0 0.0
    %803 = vmatpush1.msra.mxu0 0.0
    %804 = vmatprep.subr.mxu0 0.0
    %805 = vmatpush1.msra.mxu0 0.0
    %806 = vmatprep.mubr.f32.mxu0 0.0
    %807 = vmatmul.mubr.f32.gmra.mrb[0].mxu0 %v740
    %v808 = vpop.f32.mrb[0].mxu0
    %v809 = vadd.f32 0.0, %v808
    %v810 = vpop.f32.mrb[0].mxu0
    %811 = vdwg.mxu0
    %814 = vrot.lane.b32.xlu0 %v733, 16
    %v815 = vpop.permute.xlu0 %814
    %816 = vrot.lane.b32.xlu0 %v809, 16
    %v817 = vpop.permute.xlu0 %816
    %vm820 = vcmask 261248
    %821 = vst.msk [vmem:[#allocation7] sm:$0xff] %vm820, %v815
    %822 = vst.msk [vmem:[#allocation7 + $0x8] sm:$0xff] %vm820, %v817
    // Predicated region
    $region22: #{tpu_custom_call.1} parent=1 // pred_check
      _
    $region23: #{tpu_custom_call.1} parent=1 // pred_check_branch
      %824 = sbr.rel (0) target = $region25
    $region24: #{tpu_custom_call.1} parent=1 // pred_region
      %s826 = ssub.s32 256, 256
      %827 = vsyncadd [#allocation4], %s826
      %s828 = sshll.u32 [#allocation7], 4
      %s829 = int_to_ptr.vmem [resolvable:$true] %s828
      %834 = dma.vmem_to_hbm [thread:$0]  %s829, 256, %s3, [#allocation4], 128, 128, 8
    $region25: #{tpu_custom_call.1} parent=1 // pred_fallthru
      _
    // Predicated region
    $region26: #{tpu_custom_call.1} parent=1 // pred_check
      _
    $region27: #{tpu_custom_call.1} parent=1 // pred_check_branch
      %836 = sbr.rel (0) target = $region29
    $region28: #{tpu_custom_call.1} parent=1 // pred_region
      %837 = dma.done [#allocation4], 256
    $region29: #{tpu_custom_call.1} parent=1 // pred_fallthru
      _
    %838 = vsyncpa [#allocation3], 1
    %839 = vsyncpa [#allocation6], 1
    %840 = vsyncpa [#allocation4], 1

</llo_original>
